<compile_context>
chip_gen: v7x
topology: tpu7x:2x2x1
jax: 0.10.0
libtpu: 0.0.40
codegen_flags: <defaults>
</compile_context>

<pallas_src>
import jax
import jax.numpy as jnp
from jax.experimental import pallas as pl
from jax.experimental.pallas import tpu as pltpu

_LANE = 128        # lane width  -> hidden feature dims padded to this
_SUBLANE = 8       # f32 sublane -> batch tile granularity
_MAX_TILE_B = 512  # max batch rows per grid step (sweepable)


def _round_up(n, m):
    return (n + m - 1) // m * m


def _padded_layer_dims(dims):
    """Per-layer (in, out) dims actually used by the kernel.

    Hidden dims are lane-padded to multiples of 128; the true input width
    (dims[0]) and the true class count (dims[-1]) stay UNPADDED so no wrapper
    pad/slice passes and no padded-logit masking are needed.
    """
    n_layers = len(dims) - 1
    in_dims = tuple(dims[l] if l == 0 else _round_up(dims[l], _LANE)
                    for l in range(n_layers))
    out_dims = tuple(dims[l + 1] if l == n_layers - 1
                     else _round_up(dims[l + 1], _LANE)
                     for l in range(n_layers))
    return in_dims, out_dims


# ----------------------------- fused kernel -------------------------------- #

def _make_fused_kernel(out_dims, n_layers):
    """[matmul + bias + relu]*(L-1) + matmul + exact log_softmax, unrolled."""

    def kernel(*refs):
        x_ref = refs[0]
        w_refs = refs[1:1 + n_layers]
        b_ref = refs[1 + n_layers]          # packed biases (L, max_out_pad) f32
        o_ref = refs[2 + n_layers]

        b_all = b_ref[...]                  # one load, hoisted above the loop
        h = x_ref[...].astype(jnp.float32)

        for l in range(n_layers):
            w = w_refs[l][...]
            dout = out_dims[l]
            z = jnp.dot(h.astype(w.dtype), w,
                        preferred_element_type=jnp.float32)
            z = z + b_all[l:l + 1, :dout]   # static slice of packed bias row
            if l < n_layers - 1:
                h = jnp.maximum(z, 0.0)
            else:
                # z already has exactly dims[-1] lanes -> no padded-lane mask.
                m = jnp.max(z, axis=-1, keepdims=True)
                lse = jnp.log(jnp.sum(jnp.exp(z - m), axis=-1,
                                      keepdims=True)) + m
                o_ref[...] = (z - lse).astype(o_ref.dtype)

    return kernel


# ----------------------------- params -------------------------------------- #

def init_decoder_params(key, dims):
    """nn.Linear-style init: U(-1/sqrt(fan_in), +1/sqrt(fan_in)).
    W stored (D_in, D_out) (transpose of PyTorch), b stored (D_out,)."""
    if len(dims) < 2:
        raise ValueError("Inputs list has to be at least lenght:2")
    params = []
    for i in range(len(dims) - 1):
        key, kw, kb = jax.random.split(key, 3)
        bound = float(dims[i]) ** -0.5
        w = jax.random.uniform(kw, (dims[i], dims[i + 1]), jnp.float32,
                               minval=-bound, maxval=bound)
        b = jax.random.uniform(kb, (dims[i + 1],), jnp.float32,
                               minval=-bound, maxval=bound)
        params.append((w, b))
    return params


def pack_decoder_params(params, dims, weight_dtype=jnp.bfloat16):
    """One-time padding/packing (at init, not per forward call).

    weight_dtype=jnp.bfloat16 halves resident weight VMEM and weight DMA bytes
    (recommended on v6e/v7x); pass jnp.float32 when a tight match against an
    f32 reference is required.  Biases always stay f32.
    """
    dims = tuple(int(d) for d in dims)
    in_dims, out_dims = _padded_layer_dims(dims)
    w_pack = []
    for l, (w, _) in enumerate(params):
        wp = jnp.pad(w, ((0, in_dims[l] - dims[l]),
                         (0, out_dims[l] - dims[l + 1])))
        w_pack.append(wp.astype(weight_dtype))
    max_out = _round_up(max(out_dims), _LANE)
    b_rows = [jnp.pad(b, (0, max_out - b.shape[0])) for (_, b) in params]
    b_pack = jnp.stack(b_rows, axis=0).astype(jnp.float32)   # (L, max_out_pad)
    return tuple(w_pack), b_pack


# ----------------------------- forward -------------------------------------- #

def make_decoder_forward(dims, single_buffer_weights=True):
    dims = tuple(int(d) for d in dims)
    n_layers = len(dims) - 1
    in_dims, out_dims = _padded_layer_dims(dims)
    kernel = _make_fused_kernel(out_dims, n_layers)

    def forward(x, w_pack, b_pack):
        B = x.shape[0]

        # Batch tile: ~B/2 (>=2 grid steps -> both v7x TensorCores on the
        # "parallel" axis), capped at 512 rows, multiple of 8 sublanes.  Ragged
        # last tile handled by the cdiv grid -- no batch-padding HBM pass.
        if B <= _SUBLANE:
            tile_b = B                      # block == full dim (always legal)
        else:
            tile_b = min(_MAX_TILE_B, _round_up(pl.cdiv(B, 2), _SUBLANE))
        grid_b = pl.cdiv(B, tile_b)

        def invariant_spec(shape):
            # Same block every grid step -> VMEM-resident; single buffer saves
            # the pointless second copy (matters on v7x's 64 MiB VMEM).
            if single_buffer_weights:
                return pl.BlockSpec(shape, lambda i: (0, 0),
                                    pipeline_mode=pl.Buffered(1))
            return pl.BlockSpec(shape, lambda i: (0, 0))

        in_specs = [pl.BlockSpec((tile_b, dims[0]), lambda i: (i, 0))]
        for l in range(n_layers):
            in_specs.append(invariant_spec((in_dims[l], out_dims[l])))
        in_specs.append(invariant_spec(b_pack.shape))

        # TODO(synk): for wide layers (weights >> scoped VMEM: ~16MiB v5e /
        # 32MiB v6e / 32-of-64MiB v7x) add a K-tiled inner pipeline per layer
        # (pltpu.emit_pipeline) and set vmem_limit_bytes explicitly instead of
        # keeping every layer fully resident.
        return pl.pallas_call(
            kernel,
            out_shape=jax.ShapeDtypeStruct((B, dims[-1]), jnp.float32),
            grid=(grid_b,),
            in_specs=in_specs,
            out_specs=pl.BlockSpec((tile_b, dims[-1]), lambda i: (i, 0)),
            compiler_params=pltpu.CompilerParams(
                dimension_semantics=("parallel",)),
        )(x, *w_pack, b_pack)

    return jax.jit(forward)


# ------------------------------- main --------------------------------------- #

if __name__ == "__main__":
    key = jax.random.PRNGKey(0)
    dims = [32, 64, 48, 16]      # Decoder(dims): 3 Linear layers
    batch = 12                   # not a multiple of the batch tile -> ragged last block

    k_x, k_p = jax.random.split(key)
    x = jax.random.normal(k_x, (batch, dims[0]), jnp.float32)
    params = init_decoder_params(k_p, dims)

    # pure-JAX reference (unpadded f32 params)
    ref = x
    for (w, b) in params[:-1]:
        ref = jax.nn.relu(ref @ w + b[None, :])
    w_last, b_last = params[-1]
    ref = jax.nn.log_softmax(ref @ w_last + b_last[None, :], axis=-1)

    # --- f32 weights: tight check against the f32 reference ---
    w32, b32 = pack_decoder_params(params, dims, weight_dtype=jnp.float32)
    forward = make_decoder_forward(dims)
    try:
        out32 = jax.block_until_ready(forward(x, w32, b32))
    except Exception:
        # Graceful fallback if single-buffered invariant blocks are rejected
        # by this Pallas build: default double-buffered specs.
        forward = make_decoder_forward(dims, single_buffer_weights=False)
        out32 = jax.block_until_ready(forward(x, w32, b32))

    assert out32.shape == (batch, dims[-1])
    assert jnp.allclose(out32, ref, atol=1e-5, rtol=1e-5)
    assert jnp.allclose(jnp.sum(jnp.exp(out32), axis=-1), 1.0, atol=1e-5)

    # --- bf16 weights (v6e/v7x recommendation): looser tolerance ---
    wbf, bbf = pack_decoder_params(params, dims)   # default weight_dtype=bf16
    outbf = jax.block_until_ready(forward(x, wbf, bbf))
    assert outbf.shape == (batch, dims[-1])
    assert jnp.allclose(outbf, ref, atol=5e-2, rtol=5e-2)
    assert jnp.allclose(jnp.sum(jnp.exp(outbf), axis=-1), 1.0, atol=1e-3)

    print("KERNEL_OK")
</pallas_src>

<mosaic_0001>
module attributes {stable_mosaic.version = 11 : i64} {
  func.func @kernel(%arg0: i32, %arg1: memref<8x32xf32, #tpu.memory_space<vmem>>, %arg2: memref<32x128xf32, #tpu.memory_space<vmem>>, %arg3: memref<128x128xf32, #tpu.memory_space<vmem>>, %arg4: memref<128x16xf32, #tpu.memory_space<vmem>>, %arg5: memref<3x128xf32, #tpu.memory_space<vmem>>, %arg6: memref<8x16xf32, #tpu.memory_space<vmem>>) attributes {dimension_semantics = [#tpu.dimension_semantics<parallel>], iteration_bounds = array<i64: 2>, scalar_prefetch = 0 : i64, scratch_operands = 0 : i64, tpu.core_type = #tpu.core_type<tc>, window_params = [{transform_indices = @transform_0, window_bounds = array<i64: 8, 32>}, {pipeline_mode = #tpu.pipeline_mode<synchronous>, transform_indices = @transform_1, window_bounds = array<i64: 32, 128>}, {pipeline_mode = #tpu.pipeline_mode<synchronous>, transform_indices = @transform_2, window_bounds = array<i64: 128, 128>}, {pipeline_mode = #tpu.pipeline_mode<synchronous>, transform_indices = @transform_3, window_bounds = array<i64: 128, 16>}, {pipeline_mode = #tpu.pipeline_mode<synchronous>, transform_indices = @transform_4, window_bounds = array<i64: 3, 128>}, {transform_indices = @transform_5, window_bounds = array<i64: 8, 16>}]} {
    %c0 = arith.constant 0 : index
    %c0_0 = arith.constant 0 : index
    %0 = vector.load %arg5[%c0, %c0_0] : memref<3x128xf32, #tpu.memory_space<vmem>>, vector<3x128xf32>
    %c0_1 = arith.constant 0 : index
    %c0_2 = arith.constant 0 : index
    %1 = vector.load %arg1[%c0_1, %c0_2] : memref<8x32xf32, #tpu.memory_space<vmem>>, vector<8x32xf32>
    %c0_3 = arith.constant 0 : index
    %c0_4 = arith.constant 0 : index
    %2 = vector.load %arg2[%c0_3, %c0_4] : memref<32x128xf32, #tpu.memory_space<vmem>>, vector<32x128xf32>
    %cst = arith.constant dense<0.000000e+00> : vector<8x128xf32>
    %3 = tpu.matmul %1, %2, %cst {dimension_numbers = #tpu.dot_dimension_numbers<[1], [0], [0], [1], [0, 0, 1, 1], [], []>} : vector<8x32xf32>, vector<32x128xf32>, vector<8x128xf32> -> vector<8x128xf32>
    %4 = vector.extract_strided_slice %0 {offsets = [0, 0], sizes = [1, 128], strides = [1, 1]} : vector<3x128xf32> to vector<1x128xf32>
    %5 = vector.broadcast %4 : vector<1x128xf32> to vector<8x128xf32>
    %6 = arith.addf %3, %5 : vector<8x128xf32>
    %cst_5 = arith.constant 0.000000e+00 : f32
    %7 = vector.broadcast %cst_5 : f32 to vector<8x128xf32>
    %8 = arith.maximumf %6, %7 : vector<8x128xf32>
    %c0_6 = arith.constant 0 : index
    %c0_7 = arith.constant 0 : index
    %9 = vector.load %arg3[%c0_6, %c0_7] : memref<128x128xf32, #tpu.memory_space<vmem>>, vector<128x128xf32>
    %cst_8 = arith.constant dense<0.000000e+00> : vector<8x128xf32>
    %10 = tpu.matmul %8, %9, %cst_8 {dimension_numbers = #tpu.dot_dimension_numbers<[1], [0], [0], [1], [0, 0, 1, 1], [], []>} : vector<8x128xf32>, vector<128x128xf32>, vector<8x128xf32> -> vector<8x128xf32>
    %11 = vector.extract_strided_slice %0 {offsets = [1, 0], sizes = [1, 128], strides = [1, 1]} : vector<3x128xf32> to vector<1x128xf32>
    %12 = vector.broadcast %11 : vector<1x128xf32> to vector<8x128xf32>
    %13 = arith.addf %10, %12 : vector<8x128xf32>
    %cst_9 = arith.constant 0.000000e+00 : f32
    %14 = vector.broadcast %cst_9 : f32 to vector<8x128xf32>
    %15 = arith.maximumf %13, %14 : vector<8x128xf32>
    %c0_10 = arith.constant 0 : index
    %c0_11 = arith.constant 0 : index
    %16 = vector.load %arg4[%c0_10, %c0_11] : memref<128x16xf32, #tpu.memory_space<vmem>>, vector<128x16xf32>
    %cst_12 = arith.constant dense<0.000000e+00> : vector<8x16xf32>
    %17 = tpu.matmul %15, %16, %cst_12 {dimension_numbers = #tpu.dot_dimension_numbers<[1], [0], [0], [1], [0, 0, 1, 1], [], []>} : vector<8x128xf32>, vector<128x16xf32>, vector<8x16xf32> -> vector<8x16xf32>
    %18 = vector.extract_strided_slice %0 {offsets = [2, 0], sizes = [1, 16], strides = [1, 1]} : vector<3x128xf32> to vector<1x16xf32>
    %19 = vector.broadcast %18 : vector<1x16xf32> to vector<8x16xf32>
    %20 = arith.addf %17, %19 : vector<8x16xf32>
    %cst_13 = arith.constant dense<0xFF800000> : vector<8xf32>
    %21 = vector.multi_reduction <maximumf>, %20, %cst_13 [1] : vector<8x16xf32> to vector<8xf32>
    %22 = vector.shape_cast %21 : vector<8xf32> to vector<8x1xf32>
    %23 = vector.broadcast %22 : vector<8x1xf32> to vector<8x16xf32>
    %24 = arith.subf %20, %23 : vector<8x16xf32>
    %25 = math.exp %24 : vector<8x16xf32>
    %cst_14 = arith.constant dense<0.000000e+00> : vector<8xf32>
    %26 = vector.multi_reduction <add>, %25, %cst_14 [1] : vector<8x16xf32> to vector<8xf32>
    %27 = vector.shape_cast %26 : vector<8xf32> to vector<8x1xf32>
    %28 = math.log %27 : vector<8x1xf32>
    %29 = arith.addf %28, %22 : vector<8x1xf32>
    %30 = vector.broadcast %29 : vector<8x1xf32> to vector<8x16xf32>
    %31 = arith.subf %20, %30 : vector<8x16xf32>
    %c0_15 = arith.constant 0 : index
    %c0_16 = arith.constant 0 : index
    %32 = vector.load %arg6[%c0_15, %c0_16] : memref<8x16xf32, #tpu.memory_space<vmem>>, vector<8x16xf32>
    tpu.vector_store %arg6[%c0_15, %c0_16], %31 {strides = array<i32>} : memref<8x16xf32, #tpu.memory_space<vmem>>, vector<8x16xf32>,
    return
  }
  func.func @transform_0(%arg0: i32) -> (i32, i32) {
    %c0_i32 = arith.constant 0 : i32
    %c0_i32_0 = arith.constant 0 : i32
    return %arg0, %c0_i32 : i32, i32
  }
  func.func @transform_1(%arg0: i32) -> (i32, i32) {
    %c0_i32 = arith.constant 0 : i32
    %c0_i32_0 = arith.constant 0 : i32
    %c0_i32_1 = arith.constant 0 : i32
    return %c0_i32, %c0_i32_0 : i32, i32
  }
  func.func @transform_2(%arg0: i32) -> (i32, i32) {
    %c0_i32 = arith.constant 0 : i32
    %c0_i32_0 = arith.constant 0 : i32
    %c0_i32_1 = arith.constant 0 : i32
    return %c0_i32, %c0_i32_0 : i32, i32
  }
  func.func @transform_3(%arg0: i32) -> (i32, i32) {
    %c0_i32 = arith.constant 0 : i32
    %c0_i32_0 = arith.constant 0 : i32
    %c0_i32_1 = arith.constant 0 : i32
    return %c0_i32, %c0_i32_0 : i32, i32
  }
  func.func @transform_4(%arg0: i32) -> (i32, i32) {
    %c0_i32 = arith.constant 0 : i32
    %c0_i32_0 = arith.constant 0 : i32
    %c0_i32_1 = arith.constant 0 : i32
    return %c0_i32, %c0_i32_0 : i32, i32
  }
  func.func @transform_5(%arg0: i32) -> (i32, i32) {
    %c0_i32 = arith.constant 0 : i32
    %c0_i32_0 = arith.constant 0 : i32
    return %arg0, %c0_i32 : i32, i32
  }
}

module attributes {stable_mosaic.version = 11 : i64} {
  func.func @kernel(%arg0: i32, %arg1: memref<8x32xf32, #tpu.memory_space<vmem>>, %arg2: memref<32x128xf32, #tpu.memory_space<vmem>>, %arg3: memref<128x128xf32, #tpu.memory_space<vmem>>, %arg4: memref<128x16xf32, #tpu.memory_space<vmem>>, %arg5: memref<3x128xf32, #tpu.memory_space<vmem>>, %arg6: memref<8x16xf32, #tpu.memory_space<vmem>>) attributes {dimension_semantics = [#tpu.dimension_semantics<parallel>], iteration_bounds = array<i64: 2>, scalar_prefetch = 0 : i64, scratch_operands = 0 : i64, tpu.core_type = #tpu.core_type<tc>, window_params = [{transform_indices = @transform_0, window_bounds = array<i64: 8, 32>}, {pipeline_mode = #tpu.pipeline_mode<synchronous>, transform_indices = @transform_1, window_bounds = array<i64: 32, 128>}, {pipeline_mode = #tpu.pipeline_mode<synchronous>, transform_indices = @transform_2, window_bounds = array<i64: 128, 128>}, {pipeline_mode = #tpu.pipeline_mode<synchronous>, transform_indices = @transform_3, window_bounds = array<i64: 128, 16>}, {pipeline_mode = #tpu.pipeline_mode<synchronous>, transform_indices = @transform_4, window_bounds = array<i64: 3, 128>}, {transform_indices = @transform_5, window_bounds = array<i64: 8, 16>}]} {
    %c0 = arith.constant 0 : index
    %c0_0 = arith.constant 0 : index
    %0 = vector.load %arg5[%c0, %c0_0] : memref<3x128xf32, #tpu.memory_space<vmem>>, vector<3x128xf32>
    %c0_1 = arith.constant 0 : index
    %c0_2 = arith.constant 0 : index
    %1 = vector.load %arg1[%c0_1, %c0_2] : memref<8x32xf32, #tpu.memory_space<vmem>>, vector<8x32xf32>
    %c0_3 = arith.constant 0 : index
    %c0_4 = arith.constant 0 : index
    %2 = vector.load %arg2[%c0_3, %c0_4] : memref<32x128xf32, #tpu.memory_space<vmem>>, vector<32x128xf32>
    %cst = arith.constant dense<0.000000e+00> : vector<8x128xf32>
    %3 = tpu.matmul %1, %2, %cst {dimension_numbers = #tpu.dot_dimension_numbers<[1], [0], [0], [1], [0, 0, 1, 1], [], []>} : vector<8x32xf32>, vector<32x128xf32>, vector<8x128xf32> -> vector<8x128xf32>
    %4 = vector.extract_strided_slice %0 {offsets = [0, 0], sizes = [1, 128], strides = [1, 1]} : vector<3x128xf32> to vector<1x128xf32>
    %5 = vector.broadcast %4 : vector<1x128xf32> to vector<8x128xf32>
    %6 = arith.addf %3, %5 : vector<8x128xf32>
    %cst_5 = arith.constant 0.000000e+00 : f32
    %7 = vector.broadcast %cst_5 : f32 to vector<8x128xf32>
    %8 = arith.maximumf %6, %7 : vector<8x128xf32>
    %c0_6 = arith.constant 0 : index
    %c0_7 = arith.constant 0 : index
    %9 = vector.load %arg3[%c0_6, %c0_7] : memref<128x128xf32, #tpu.memory_space<vmem>>, vector<128x128xf32>
    %cst_8 = arith.constant dense<0.000000e+00> : vector<8x128xf32>
    %10 = tpu.matmul %8, %9, %cst_8 {dimension_numbers = #tpu.dot_dimension_numbers<[1], [0], [0], [1], [0, 0, 1, 1], [], []>} : vector<8x128xf32>, vector<128x128xf32>, vector<8x128xf32> -> vector<8x128xf32>
    %11 = vector.extract_strided_slice %0 {offsets = [1, 0], sizes = [1, 128], strides = [1, 1]} : vector<3x128xf32> to vector<1x128xf32>
    %12 = vector.broadcast %11 : vector<1x128xf32> to vector<8x128xf32>
    %13 = arith.addf %10, %12 : vector<8x128xf32>
    %cst_9 = arith.constant 0.000000e+00 : f32
    %14 = vector.broadcast %cst_9 : f32 to vector<8x128xf32>
    %15 = arith.maximumf %13, %14 : vector<8x128xf32>
    %c0_10 = arith.constant 0 : index
    %c0_11 = arith.constant 0 : index
    %16 = vector.load %arg4[%c0_10, %c0_11] : memref<128x16xf32, #tpu.memory_space<vmem>>, vector<128x16xf32>
    %cst_12 = arith.constant dense<0.000000e+00> : vector<8x16xf32>
    %17 = tpu.matmul %15, %16, %cst_12 {dimension_numbers = #tpu.dot_dimension_numbers<[1], [0], [0], [1], [0, 0, 1, 1], [], []>} : vector<8x128xf32>, vector<128x16xf32>, vector<8x16xf32> -> vector<8x16xf32>
    %18 = vector.extract_strided_slice %0 {offsets = [2, 0], sizes = [1, 16], strides = [1, 1]} : vector<3x128xf32> to vector<1x16xf32>
    %19 = vector.broadcast %18 : vector<1x16xf32> to vector<8x16xf32>
    %20 = arith.addf %17, %19 : vector<8x16xf32>
    %cst_13 = arith.constant dense<0xFF800000> : vector<8xf32>
    %21 = vector.multi_reduction <maximumf>, %20, %cst_13 [1] : vector<8x16xf32> to vector<8xf32>
    %22 = vector.shape_cast %21 : vector<8xf32> to vector<8x1xf32>
    %23 = vector.broadcast %22 : vector<8x1xf32> to vector<8x16xf32>
    %24 = arith.subf %20, %23 : vector<8x16xf32>
    %25 = math.exp %24 : vector<8x16xf32>
    %cst_14 = arith.constant dense<0.000000e+00> : vector<8xf32>
    %26 = vector.multi_reduction <add>, %25, %cst_14 [1] : vector<8x16xf32> to vector<8xf32>
    %27 = vector.shape_cast %26 : vector<8xf32> to vector<8x1xf32>
    %28 = math.log %27 : vector<8x1xf32>
    %29 = arith.addf %28, %22 : vector<8x1xf32>
    %30 = vector.broadcast %29 : vector<8x1xf32> to vector<8x16xf32>
    %31 = arith.subf %20, %30 : vector<8x16xf32>
    %c0_15 = arith.constant 0 : index
    %c0_16 = arith.constant 0 : index
    %32 = vector.load %arg6[%c0_15, %c0_16] : memref<8x16xf32, #tpu.memory_space<vmem>>, vector<8x16xf32>
    tpu.vector_store %arg6[%c0_15, %c0_16], %31 {strides = array<i32>} : memref<8x16xf32, #tpu.memory_space<vmem>>, vector<8x16xf32>,
    return
  }
  func.func @transform_0(%arg0: i32) -> (i32, i32) {
    %c0_i32 = arith.constant 0 : i32
    %c0_i32_0 = arith.constant 0 : i32
    return %arg0, %c0_i32 : i32, i32
  }
  func.func @transform_1(%arg0: i32) -> (i32, i32) {
    %c0_i32 = arith.constant 0 : i32
    %c0_i32_0 = arith.constant 0 : i32
    %c0_i32_1 = arith.constant 0 : i32
    return %c0_i32, %c0_i32_0 : i32, i32
  }
  func.func @transform_2(%arg0: i32) -> (i32, i32) {
    %c0_i32 = arith.constant 0 : i32
    %c0_i32_0 = arith.constant 0 : i32
    %c0_i32_1 = arith.constant 0 : i32
    return %c0_i32, %c0_i32_0 : i32, i32
  }
  func.func @transform_3(%arg0: i32) -> (i32, i32) {
    %c0_i32 = arith.constant 0 : i32
    %c0_i32_0 = arith.constant 0 : i32
    %c0_i32_1 = arith.constant 0 : i32
    return %c0_i32, %c0_i32_0 : i32, i32
  }
  func.func @transform_4(%arg0: i32) -> (i32, i32) {
    %c0_i32 = arith.constant 0 : i32
    %c0_i32_0 = arith.constant 0 : i32
    %c0_i32_1 = arith.constant 0 : i32
    return %c0_i32, %c0_i32_0 : i32, i32
  }
  func.func @transform_5(%arg0: i32) -> (i32, i32) {
    %c0_i32 = arith.constant 0 : i32
    %c0_i32_0 = arith.constant 0 : i32
    return %arg0, %c0_i32 : i32, i32
  }
}

</mosaic_0001>

<llo_original>
// kernel: forward.1
$region0: #{forward.1}
  #allocation0 [shape = 'u32[]', space=smem, size = 0x4, offset = 0x4, fixed_abs, tag = 'smem constant byte address 0x4 - core index']
  #allocation1 [shape = 'u32[144,128]{1,0:T(1,128)}', space=vmem, size = 0x12000, scoped, tag = 'internal scratch']
  %s0 = inlined_call_operand.vmem [shape: f32[12,32], index: 0, kind: input, shape index: {}]
  %s1 = inlined_call_operand.hbm [shape: f32[32,128], index: 1, kind: input, shape index: {}]
  %s2 = inlined_call_operand.vmem [shape: f32[128,128], index: 2, kind: input, shape index: {}]
  %s3 = inlined_call_operand.vmem [shape: f32[128,16], index: 3, kind: input, shape index: {}]
  %s4 = inlined_call_operand.vmem [shape: f32[3,128], index: 4, kind: input, shape index: {}]
  %s5 = inlined_call_operand.hbm [shape: f32[12,16], index: 5, kind: output, shape index: {}]
  %s6 = sld [smem:[#allocation0]]
  $region57: #{forward.1} parent=0
    _
  %s8 = ssub.s32 1, %s6
  %s9 = scalar_select 0, %s8, %s6
  $region1: #{forward.1} parent=0
    #allocation2 [shape = 'u8[16384]{0}', space=vmem, size = 0x4000, scoped, tag = 'input window, operand 1, single buffered']
    #allocation3 [shape = 's32[2]{0}', space=sflag, size = 0x8, scoped, tag = 'scoped memory for forward.1']
    #allocation4 [shape = 's32[2]{0}', space=sflag, size = 0x8, scoped, tag = 'scoped memory for forward.1']
    #allocation5 [shape = 'u8[8192]{0}', space=vmem, size = 0x2000, scoped, tag = 'output window, operand 0']
    %10 = vsyncpa [#allocation3], 0
    %11 = vsyncpa [#allocation4], 0
    %s12 = scalar_lea.sflag [#allocation4], 1
    %13 = vsyncpa %s12, 0
    loop: start=0, step=1, limit=4
    $region2: #{forward.1} parent=1 // loop_pre_header
      _
    $region3: #{forward.1} parent=1 // loop_header
      %s15 = sphi 0, %s19
      %p16 = scmp.ge.s32.totalorder %s15, 4
      %s25 = sphi 0, %s27
      %s28 = sphi 0, %s25
      %s29 = sphi 0, %s28
      %s45 = sphi 0, %s29
      %s49 = sphi 0, %s49
      %s51 = sphi 0, %s49
      %s52 = sphi 0, %s51
      %s66 = sphi 0, %s52
      %s70 = sphi 0, %s70
      %s72 = sphi 0, %s70
      %s73 = sphi 0, %s72
      %s87 = sphi 0, %s73
      %s91 = sphi 0, %s91
      %s93 = sphi 0, %s91
      %s94 = sphi 0, %s93
      %s108 = sphi 0, %s94
      %s112 = sphi 0, %s112
      %s114 = sphi 0, %s112
      %s115 = sphi 0, %s114
      %s129 = sphi 0, %s115
      %s135 = sphi 0, %s137
      %s138 = sphi 0, %s135
      %s139 = sphi 0, %s138
      %s155 = sphi 0, %s139
    $region4: #{forward.1} parent=1 // loop_header_branch
      %18 = sbr.rel (%p16) target = $region8
    $region5: #{forward.1} parent=1 // loop_body
      %s20 = ssub.s32 %s15, 1
      %s21 = ssub.s32 %s15, 2
      %s22 = sadd.s32 %s15, 1
      %s23 = ssub.s32 %s15, %s22
      %p24 = scmp.eq.s32.totalorder %s23, 0
      %s26 = sadd.s32 %s25, 1
      %s27 = scalar_select %p24, %s25, %s26
      %p30 = pneg %p24
      %p31 = scmp.eq.s32.totalorder %s15, 1
      %p32 = por %p30, %p31
      %p33 = scmp.ne.s32.totalorder %s25, %s28
      %p34 = scmp.eq.s32.totalorder %s15, 0
      %p35 = por %p33, %p34
      %p36 = scmp.ne.s32.totalorder %s25, %s28
      %p37 = scmp.eq.s32.totalorder %s20, 1
      %p38 = por %p36, %p37
      %p39 = scmp.ne.s32.totalorder %s28, %s29
      %p40 = scmp.eq.s32.totalorder %s20, 0
      %p41 = por %p39, %p40
      %p42 = scmp.ne.s32.totalorder %s28, %s29
      %p43 = scmp.eq.s32.totalorder %s21, 1
      %p44 = por %p42, %p43
      %p46 = scmp.ne.s32.totalorder %s29, %s45
      %p47 = scmp.eq.s32.totalorder %s21, 0
      %p48 = por %p46, %p47
      %s50 = sadd.s32 %s49, 1
      %p53 = scmp.eq.s32.totalorder %s15, 1
      %p54 = scmp.ne.s32.totalorder %s49, %s51
      %p55 = scmp.eq.s32.totalorder %s15, 0
      %p56 = por %p54, %p55
      %p57 = scmp.ne.s32.totalorder %s49, %s51
      %p58 = scmp.eq.s32.totalorder %s20, 1
      %p59 = por %p57, %p58
      %p60 = scmp.ne.s32.totalorder %s51, %s52
      %p61 = scmp.eq.s32.totalorder %s20, 0
      %p62 = por %p60, %p61
      %p63 = scmp.ne.s32.totalorder %s51, %s52
      %p64 = scmp.eq.s32.totalorder %s21, 1
      %p65 = por %p63, %p64
      %p67 = scmp.ne.s32.totalorder %s52, %s66
      %p68 = scmp.eq.s32.totalorder %s21, 0
      %p69 = por %p67, %p68
      %s71 = sadd.s32 %s70, 1
      %p74 = scmp.eq.s32.totalorder %s15, 1
      %p75 = scmp.ne.s32.totalorder %s70, %s72
      %p76 = scmp.eq.s32.totalorder %s15, 0
      %p77 = por %p75, %p76
      %p78 = scmp.ne.s32.totalorder %s70, %s72
      %p79 = scmp.eq.s32.totalorder %s20, 1
      %p80 = por %p78, %p79
      %p81 = scmp.ne.s32.totalorder %s72, %s73
      %p82 = scmp.eq.s32.totalorder %s20, 0
      %p83 = por %p81, %p82
      %p84 = scmp.ne.s32.totalorder %s72, %s73
      %p85 = scmp.eq.s32.totalorder %s21, 1
      %p86 = por %p84, %p85
      %p88 = scmp.ne.s32.totalorder %s73, %s87
      %p89 = scmp.eq.s32.totalorder %s21, 0
      %p90 = por %p88, %p89
      %s92 = sadd.s32 %s91, 1
      %p95 = scmp.eq.s32.totalorder %s15, 1
      %p96 = scmp.ne.s32.totalorder %s91, %s93
      %p97 = scmp.eq.s32.totalorder %s15, 0
      %p98 = por %p96, %p97
      %p99 = scmp.ne.s32.totalorder %s91, %s93
      %p100 = scmp.eq.s32.totalorder %s20, 1
      %p101 = por %p99, %p100
      %p102 = scmp.ne.s32.totalorder %s93, %s94
      %p103 = scmp.eq.s32.totalorder %s20, 0
      %p104 = por %p102, %p103
      %p105 = scmp.ne.s32.totalorder %s93, %s94
      %p106 = scmp.eq.s32.totalorder %s21, 1
      %p107 = por %p105, %p106
      %p109 = scmp.ne.s32.totalorder %s94, %s108
      %p110 = scmp.eq.s32.totalorder %s21, 0
      %p111 = por %p109, %p110
      %s113 = sadd.s32 %s112, 1
      %p116 = scmp.eq.s32.totalorder %s15, 1
      %p117 = scmp.ne.s32.totalorder %s112, %s114
      %p118 = scmp.eq.s32.totalorder %s15, 0
      %p119 = por %p117, %p118
      %p120 = scmp.ne.s32.totalorder %s112, %s114
      %p121 = scmp.eq.s32.totalorder %s20, 1
      %p122 = por %p120, %p121
      %p123 = scmp.ne.s32.totalorder %s114, %s115
      %p124 = scmp.eq.s32.totalorder %s20, 0
      %p125 = por %p123, %p124
      %p126 = scmp.ne.s32.totalorder %s114, %s115
      %p127 = scmp.eq.s32.totalorder %s21, 1
      %p128 = por %p126, %p127
      %p130 = scmp.ne.s32.totalorder %s115, %s129
      %p131 = scmp.eq.s32.totalorder %s21, 0
      %p132 = por %p130, %p131
      %s133 = ssub.s32 %s15, %s22
      %p134 = scmp.eq.s32.totalorder %s133, 0
      %s136 = sadd.s32 %s135, 1
      %s137 = scalar_select %p134, %s135, %s136
      %p140 = pneg %p134
      %p141 = scmp.eq.s32.totalorder %s15, 1
      %p142 = por %p140, %p141
      %p143 = scmp.ne.s32.totalorder %s135, %s138
      %p144 = scmp.eq.s32.totalorder %s15, 0
      %p145 = por %p143, %p144
      %p146 = scmp.ne.s32.totalorder %s135, %s138
      %p147 = scmp.eq.s32.totalorder %s20, 1
      %p148 = por %p146, %p147
      %p149 = scmp.ne.s32.totalorder %s138, %s139
      %p150 = scmp.eq.s32.totalorder %s20, 0
      %p151 = por %p149, %p150
      %p152 = scmp.ne.s32.totalorder %s138, %s139
      %p153 = scmp.eq.s32.totalorder %s21, 1
      %p154 = por %p152, %p153
      %p156 = scmp.ne.s32.totalorder %s139, %s155
      %p157 = scmp.eq.s32.totalorder %s21, 0
      %p158 = por %p156, %p157
      %p159 = scmp.le.s32.totalorder 1, %s15
      %p160 = scmp.lt.s32.totalorder %s15, 3
      %p161 = pnand %p159, %p160
      %p162 = pneg %p161
      // Predicated region
      $region9: #{forward.1} parent=5 // pred_check
        _
      $region10: #{forward.1} parent=5 // pred_check_branch
        %164 = sbr.rel (%p161) target = $region12
      $region11: #{forward.1} parent=5 // pred_region
        %s165 = ssub.s32 %s15, 1
        // Predicated region
        $region13: #{forward.1} parent=11 // pred_check
          %p166 = pneg %p62
        $region14: #{forward.1} parent=11 // pred_check_branch
          %168 = sbr.rel (%p166) target = $region16
        $region15: #{forward.1} parent=11 // pred_region
          %s170 = ssub.s32 512, 512
          %171 = vsyncadd [#allocation3], %s170
          %s172 = sshll.u32 [#allocation2], 4
          %s173 = int_to_ptr.vmem [resolvable:$true] %s172
          %178 = dma.hbm_to_vmem [thread:$0]  %s1, 512, %s173, [#allocation3], 128, 128, 8
        $region16: #{forward.1} parent=11 // pred_fallthru
          _
        // Predicated region
        $region17: #{forward.1} parent=11 // pred_check
          %p179 = pneg %p83
        $region18: #{forward.1} parent=11 // pred_check_branch
          %181 = sbr.rel (%p179) target = $region20
        $region19: #{forward.1} parent=11 // pred_region
          _
        $region20: #{forward.1} parent=11 // pred_fallthru
          _
        // Predicated region
        $region21: #{forward.1} parent=11 // pred_check
          %p182 = pneg %p104
        $region22: #{forward.1} parent=11 // pred_check_branch
          %184 = sbr.rel (%p182) target = $region24
        $region23: #{forward.1} parent=11 // pred_region
          _
        $region24: #{forward.1} parent=11 // pred_fallthru
          _
        // Predicated region
        $region25: #{forward.1} parent=11 // pred_check
          %p185 = pneg %p125
        $region26: #{forward.1} parent=11 // pred_check_branch
          %187 = sbr.rel (%p185) target = $region28
        $region27: #{forward.1} parent=11 // pred_region
          _
        $region28: #{forward.1} parent=11 // pred_fallthru
          _
      $region12: #{forward.1} parent=5 // pred_fallthru
        _
      %p188 = scmp.lt.s32.totalorder %s15, 2
      // Predicated region
      $region29: #{forward.1} parent=5 // pred_check
        %p189 = pneg %p188
      $region30: #{forward.1} parent=5 // pred_check_branch
        %191 = sbr.rel (%p189) target = $region32
      $region31: #{forward.1} parent=5 // pred_region
        // Predicated region
        $region33: #{forward.1} parent=31 // pred_check
          %p192 = pneg %p35
        $region34: #{forward.1} parent=31 // pred_check_branch
          %194 = sbr.rel (%p192) target = $region36
        $region35: #{forward.1} parent=31 // pred_region
          %p195 = scmp.lt.s32.totalorder %s15, 1
          %s196 = scalar_select %p195, %s15, 1
          %s197 = smul.addr %s196, 8
          %s198 = scalar_lea.vmem %s0, %s197
        $region36: #{forward.1} parent=31 // pred_fallthru
          _
      $region32: #{forward.1} parent=5 // pred_fallthru
        _
      %p199 = scmp.le.s32.totalorder 1, %s15
      %p200 = scmp.lt.s32.totalorder %s15, 3
      %p201 = pnand %p199, %p200
      %p202 = pneg %p201
      // Predicated region
      $region37: #{forward.1} parent=5 // pred_check
        _
      $region38: #{forward.1} parent=5 // pred_check_branch
        %204 = sbr.rel (%p201) target = $region40
      $region39: #{forward.1} parent=5 // pred_region
        %s205 = ssub.s32 %s15, 1
        // Predicated region
        $region41: #{forward.1} parent=39 // pred_check
          %p206 = pneg %p62
        $region42: #{forward.1} parent=39 // pred_check_branch
          %208 = sbr.rel (%p206) target = $region44
        $region43: #{forward.1} parent=39 // pred_region
          %209 = dma.done [#allocation3], 512
        $region44: #{forward.1} parent=39 // pred_fallthru
          _
        %p210 = scmp.lt.s32.totalorder %s20, 1
        %s211 = scalar_select %p210, %s20, 1
        %s212 = smul.addr %s211, 8
        %s213 = scalar_lea.vmem %s0, %s212
        %p214 = pneg %p41
        %p215 = pneg %p38
        %p216 = pneg %p62
        %p217 = pneg %p59
        %p218 = pneg %p83
        %p219 = pneg %p80
        %p220 = pneg %p104
        %p221 = pneg %p101
        %p222 = pneg %p125
        %p223 = pneg %p122
        %p224 = pneg %p151
        %p225 = pneg %p148
        %s226 = sand.u32 %s138, 1
        %s227 = scalar_lea.sflag [#allocation4], %s226
        %s228 = sand.u32 %s138, 1
        %s229 = smul.addr %s228, 8
        %s230 = scalar_lea.vmem [#allocation5], %s229
        %p231 = scmp.lt.s32.totalorder %s20, 1
        %s232 = scalar_select %p231, %s20, 1
        %s233 = smul.addr %s232, 8
        %s234 = scalar_lea.vmem %s0, %s233
        %v235 = vld [vmem:[%s4] sm:$0x7]
        %v236 = vld [vmem:[%s234] sm:$0xff]
        %v237 = vld [vmem:[#allocation2] sm:$0xff]
        %v238 = vld [vmem:[#allocation2 + $0x8] sm:$0xff]
        %v239 = vld [vmem:[#allocation2 + $0x10] sm:$0xff]
        %v240 = vld [vmem:[#allocation2 + $0x18] sm:$0xff]
        %v241 = vlaneseq
        %v242 = vshrl.u32 %v241, 7
        %v243 = vsub.s32 0, %v242
        %v244 = vrot.slane %v235, %v243
        %vm245 = vcmask 261120
        %v247 = vsel %vm245, %v236, 0
        %249 = vmatprep.subr.mxu0 0.0
        %250 = vmatpush1.msra.mxu0 %v237
        %251 = vmatprep.subr.mxu0 0.0
        %252 = vmatpush1.msra.mxu0 %v238
        %253 = vmatprep.subr.mxu0 0.0
        %254 = vmatpush1.msra.mxu0 %v239
        %255 = vmatprep.subr.mxu0 0.0
        %256 = vmatpush1.msra.mxu0 %v240
        %257 = vmatprep.subr.mxu0 0.0
        %258 = vmatpush1.msra.mxu0 0.0
        %259 = vmatprep.subr.mxu0 0.0
        %260 = vmatpush1.msra.mxu0 0.0
        %261 = vmatprep.subr.mxu0 0.0
        %262 = vmatpush1.msra.mxu0 0.0
        %263 = vmatprep.subr.mxu0 0.0
        %264 = vmatpush1.msra.mxu0 0.0
        %265 = vmatprep.subr.mxu0 0.0
        %266 = vmatpush1.msra.mxu0 0.0
        %267 = vmatprep.subr.mxu0 0.0
        %268 = vmatpush1.msra.mxu0 0.0
        %269 = vmatprep.subr.mxu0 0.0
        %270 = vmatpush1.msra.mxu0 0.0
        %271 = vmatprep.subr.mxu0 0.0
        %272 = vmatpush1.msra.mxu0 0.0
        %273 = vmatprep.subr.mxu0 0.0
        %274 = vmatpush1.msra.mxu0 0.0
        %275 = vmatprep.subr.mxu0 0.0
        %276 = vmatpush1.msra.mxu0 0.0
        %277 = vmatprep.subr.mxu0 0.0
        %278 = vmatpush1.msra.mxu0 0.0
        %279 = vmatprep.subr.mxu0 0.0
        %280 = vmatpush1.msra.mxu0 0.0
        %281 = vmatprep.subr.mxu0 0.0
        %282 = vmatpush1.msra.mxu0 0.0
        %283 = vmatprep.subr.mxu0 0.0
        %284 = vmatpush1.msra.mxu0 0.0
        %285 = vmatprep.subr.mxu0 0.0
        %286 = vmatpush1.msra.mxu0 0.0
        %287 = vmatprep.subr.mxu0 0.0
        %288 = vmatpush1.msra.mxu0 0.0
        %289 = vmatprep.subr.mxu0 0.0
        %290 = vmatpush1.msra.mxu0 0.0
        %291 = vmatprep.subr.mxu0 0.0
        %292 = vmatpush1.msra.mxu0 0.0
        %293 = vmatprep.subr.mxu0 0.0
        %294 = vmatpush1.msra.mxu0 0.0
        %295 = vmatprep.subr.mxu0 0.0
        %296 = vmatpush1.msra.mxu0 0.0
        %297 = vmatprep.subr.mxu0 0.0
        %298 = vmatpush1.msra.mxu0 0.0
        %299 = vmatprep.subr.mxu0 0.0
        %300 = vmatpush1.msra.mxu0 0.0
        %301 = vmatprep.subr.mxu0 0.0
        %302 = vmatpush1.msra.mxu0 0.0
        %303 = vmatprep.subr.mxu0 0.0
        %304 = vmatpush1.msra.mxu0 0.0
        %305 = vmatprep.subr.mxu0 0.0
        %306 = vmatpush1.msra.mxu0 0.0
        %307 = vmatprep.subr.mxu0 0.0
        %308 = vmatpush1.msra.mxu0 0.0
        %309 = vmatprep.subr.mxu0 0.0
        %310 = vmatpush1.msra.mxu0 0.0
        %311 = vmatprep.subr.mxu0 0.0
        %312 = vmatpush1.msra.mxu0 0.0
        %313 = vmatprep.mubr.f32.mxu0 0.0
        %314 = vmatmul.mubr.f32.gmra.mrb[0].mxu0 %v247
        %v315 = vpop.f32.mrb[0].mxu0
        %v316 = vadd.f32 %v244, %v315
        %v317 = vpop.f32.mrb[0].mxu0
        %318 = vdwg.mxu0
        %v319 = vmax.f32 %v316, 0.0
        %v320 = vld [vmem:[%s2] sm:$0xff]
        %v321 = vld [vmem:[%s2 + $0x8] sm:$0xff]
        %v322 = vld [vmem:[%s2 + $0x10] sm:$0xff]
        %v323 = vld [vmem:[%s2 + $0x18] sm:$0xff]
        %v324 = vld [vmem:[%s2 + $0x20] sm:$0xff]
        %v325 = vld [vmem:[%s2 + $0x28] sm:$0xff]
        %v326 = vld [vmem:[%s2 + $0x30] sm:$0xff]
        %v327 = vld [vmem:[%s2 + $0x38] sm:$0xff]
        %v328 = vld [vmem:[%s2 + $0x40] sm:$0xff]
        %v329 = vld [vmem:[%s2 + $0x48] sm:$0xff]
        %v330 = vld [vmem:[%s2 + $0x50] sm:$0xff]
        %v331 = vld [vmem:[%s2 + $0x58] sm:$0xff]
        %v332 = vld [vmem:[%s2 + $0x60] sm:$0xff]
        %v333 = vld [vmem:[%s2 + $0x68] sm:$0xff]
        %v334 = vld [vmem:[%s2 + $0x70] sm:$0xff]
        %v335 = vld [vmem:[%s2 + $0x78] sm:$0xff]
        %v336 = vlaneseq
        %v337 = vshrl.u32 %v336, 7
        %v338 = vsub.s32 1, %v337
        %v339 = vrot.slane %v235, %v338
        %340 = vmatprep.subr.mxu0 0.0
        %341 = vmatpush1.msra.mxu0 %v320
        %342 = vmatprep.subr.mxu0 0.0
        %343 = vmatpush1.msra.mxu0 %v321
        %344 = vmatprep.subr.mxu0 0.0
        %345 = vmatpush1.msra.mxu0 %v322
        %346 = vmatprep.subr.mxu0 0.0
        %347 = vmatpush1.msra.mxu0 %v323
        %348 = vmatprep.subr.mxu0 0.0
        %349 = vmatpush1.msra.mxu0 %v324
        %350 = vmatprep.subr.mxu0 0.0
        %351 = vmatpush1.msra.mxu0 %v325
        %352 = vmatprep.subr.mxu0 0.0
        %353 = vmatpush1.msra.mxu0 %v326
        %354 = vmatprep.subr.mxu0 0.0
        %355 = vmatpush1.msra.mxu0 %v327
        %356 = vmatprep.subr.mxu0 0.0
        %357 = vmatpush1.msra.mxu0 %v328
        %358 = vmatprep.subr.mxu0 0.0
        %359 = vmatpush1.msra.mxu0 %v329
        %360 = vmatprep.subr.mxu0 0.0
        %361 = vmatpush1.msra.mxu0 %v330
        %362 = vmatprep.subr.mxu0 0.0
        %363 = vmatpush1.msra.mxu0 %v331
        %364 = vmatprep.subr.mxu0 0.0
        %365 = vmatpush1.msra.mxu0 %v332
        %366 = vmatprep.subr.mxu0 0.0
        %367 = vmatpush1.msra.mxu0 %v333
        %368 = vmatprep.subr.mxu0 0.0
        %369 = vmatpush1.msra.mxu0 %v334
        %370 = vmatprep.subr.mxu0 0.0
        %371 = vmatpush1.msra.mxu0 %v335
        %372 = vmatprep.subr.mxu0 0.0
        %373 = vmatpush1.msra.mxu0 0.0
        %374 = vmatprep.subr.mxu0 0.0
        %375 = vmatpush1.msra.mxu0 0.0
        %376 = vmatprep.subr.mxu0 0.0
        %377 = vmatpush1.msra.mxu0 0.0
        %378 = vmatprep.subr.mxu0 0.0
        %379 = vmatpush1.msra.mxu0 0.0
        %380 = vmatprep.subr.mxu0 0.0
        %381 = vmatpush1.msra.mxu0 0.0
        %382 = vmatprep.subr.mxu0 0.0
        %383 = vmatpush1.msra.mxu0 0.0
        %384 = vmatprep.subr.mxu0 0.0
        %385 = vmatpush1.msra.mxu0 0.0
        %386 = vmatprep.subr.mxu0 0.0
        %387 = vmatpush1.msra.mxu0 0.0
        %388 = vmatprep.subr.mxu0 0.0
        %389 = vmatpush1.msra.mxu0 0.0
        %390 = vmatprep.subr.mxu0 0.0
        %391 = vmatpush1.msra.mxu0 0.0
        %392 = vmatprep.subr.mxu0 0.0
        %393 = vmatpush1.msra.mxu0 0.0
        %394 = vmatprep.subr.mxu0 0.0
        %395 = vmatpush1.msra.mxu0 0.0
        %396 = vmatprep.subr.mxu0 0.0
        %397 = vmatpush1.msra.mxu0 0.0
        %398 = vmatprep.subr.mxu0 0.0
        %399 = vmatpush1.msra.mxu0 0.0
        %400 = vmatprep.subr.mxu0 0.0
        %401 = vmatpush1.msra.mxu0 0.0
        %402 = vmatprep.subr.mxu0 0.0
        %403 = vmatpush1.msra.mxu0 0.0
        %404 = vmatprep.mubr.f32.mxu0 0.0
        %405 = vmatmul.mubr.f32.gmra.mrb[0].mxu0 %v319
        %v406 = vpop.f32.mrb[0].mxu0
        %v407 = vadd.f32 %v339, %v406
        %v408 = vpop.f32.mrb[0].mxu0
        %409 = vdwg.mxu0
        %v410 = vmax.f32 %v407, 0.0
        %v411 = vld [vmem:[%s3] sm:$0xff]
        %v412 = vld [vmem:[%s3 + $0x8] sm:$0xff]
        %v413 = vld [vmem:[%s3 + $0x10] sm:$0xff]
        %v414 = vld [vmem:[%s3 + $0x18] sm:$0xff]
        %v415 = vld [vmem:[%s3 + $0x20] sm:$0xff]
        %v416 = vld [vmem:[%s3 + $0x28] sm:$0xff]
        %v417 = vld [vmem:[%s3 + $0x30] sm:$0xff]
        %v418 = vld [vmem:[%s3 + $0x38] sm:$0xff]
        %v419 = vld [vmem:[%s3 + $0x40] sm:$0xff]
        %v420 = vld [vmem:[%s3 + $0x48] sm:$0xff]
        %v421 = vld [vmem:[%s3 + $0x50] sm:$0xff]
        %v422 = vld [vmem:[%s3 + $0x58] sm:$0xff]
        %v423 = vld [vmem:[%s3 + $0x60] sm:$0xff]
        %v424 = vld [vmem:[%s3 + $0x68] sm:$0xff]
        %v425 = vld [vmem:[%s3 + $0x70] sm:$0xff]
        %v426 = vld [vmem:[%s3 + $0x78] sm:$0xff]
        %v427 = vlaneseq
        %v428 = vshrl.u32 %v427, 7
        %v429 = vsub.s32 2, %v428
        %v430 = vrot.slane %v235, %v429
        %431 = vmatprep.subr.mxu0 0.0
        %432 = vmatpush1.msra.mxu0 %v411
        %433 = vmatprep.subr.mxu0 0.0
        %434 = vmatpush1.msra.mxu0 %v412
        %435 = vmatprep.subr.mxu0 0.0
        %436 = vmatpush1.msra.mxu0 %v413
        %437 = vmatprep.subr.mxu0 0.0
        %438 = vmatpush1.msra.mxu0 %v414
        %439 = vmatprep.subr.mxu0 0.0
        %440 = vmatpush1.msra.mxu0 %v415
        %441 = vmatprep.subr.mxu0 0.0
        %442 = vmatpush1.msra.mxu0 %v416
        %443 = vmatprep.subr.mxu0 0.0
        %444 = vmatpush1.msra.mxu0 %v417
        %445 = vmatprep.subr.mxu0 0.0
        %446 = vmatpush1.msra.mxu0 %v418
        %447 = vmatprep.subr.mxu0 0.0
        %448 = vmatpush1.msra.mxu0 %v419
        %449 = vmatprep.subr.mxu0 0.0
        %450 = vmatpush1.msra.mxu0 %v420
        %451 = vmatprep.subr.mxu0 0.0
        %452 = vmatpush1.msra.mxu0 %v421
        %453 = vmatprep.subr.mxu0 0.0
        %454 = vmatpush1.msra.mxu0 %v422
        %455 = vmatprep.subr.mxu0 0.0
        %456 = vmatpush1.msra.mxu0 %v423
        %457 = vmatprep.subr.mxu0 0.0
        %458 = vmatpush1.msra.mxu0 %v424
        %459 = vmatprep.subr.mxu0 0.0
        %460 = vmatpush1.msra.mxu0 %v425
        %461 = vmatprep.subr.mxu0 0.0
        %462 = vmatpush1.msra.mxu0 %v426
        %463 = vmatprep.subr.mxu0 0.0
        %464 = vmatpush1.msra.mxu0 0.0
        %465 = vmatprep.subr.mxu0 0.0
        %466 = vmatpush1.msra.mxu0 0.0
        %467 = vmatprep.subr.mxu0 0.0
        %468 = vmatpush1.msra.mxu0 0.0
        %469 = vmatprep.subr.mxu0 0.0
        %470 = vmatpush1.msra.mxu0 0.0
        %471 = vmatprep.subr.mxu0 0.0
        %472 = vmatpush1.msra.mxu0 0.0
        %473 = vmatprep.subr.mxu0 0.0
        %474 = vmatpush1.msra.mxu0 0.0
        %475 = vmatprep.subr.mxu0 0.0
        %476 = vmatpush1.msra.mxu0 0.0
        %477 = vmatprep.subr.mxu0 0.0
        %478 = vmatpush1.msra.mxu0 0.0
        %479 = vmatprep.subr.mxu0 0.0
        %480 = vmatpush1.msra.mxu0 0.0
        %481 = vmatprep.subr.mxu0 0.0
        %482 = vmatpush1.msra.mxu0 0.0
        %483 = vmatprep.subr.mxu0 0.0
        %484 = vmatpush1.msra.mxu0 0.0
        %485 = vmatprep.subr.mxu0 0.0
        %486 = vmatpush1.msra.mxu0 0.0
        %487 = vmatprep.subr.mxu0 0.0
        %488 = vmatpush1.msra.mxu0 0.0
        %489 = vmatprep.subr.mxu0 0.0
        %490 = vmatpush1.msra.mxu0 0.0
        %491 = vmatprep.subr.mxu0 0.0
        %492 = vmatpush1.msra.mxu0 0.0
        %493 = vmatprep.subr.mxu0 0.0
        %494 = vmatpush1.msra.mxu0 0.0
        %495 = vmatprep.mubr.f32.mxu0 0.0
        %496 = vmatmul.mubr.f32.gmra.mrb[0].mxu0 %v410
        %v497 = vpop.f32.mrb[0].mxu0
        %v498 = vadd.f32 %v430, %v497
        %v499 = vpop.f32.mrb[0].mxu0
        %500 = vdwg.mxu0
        %vm501 = vcmask 130048
        %v502 = vsel %vm501, %v498, -inf
        %503 = vmax.xlane.f32.xlu0 %v502
        %v504 = vpop.xlane.xlu0 %503
        %v505 = vsub.f32 %v498, %v504
        %v506 = vmul.f32 %v505, 1.442695
        %v507 = vpow.pop %v506
        %v508 = vsel %vm501, %v507, 0.0
        %509 = vadd.xlane.f32.xlu0 %v508
        %v510 = vpop.xlane.xlu0 %509
        %v511 = vlog2.pop %v510
        %v512 = vmul.f32 %v511, 0.6931472
        %v513 = vadd.f32 %v512, %v504
        %v514 = vsub.f32 %v498, %v513
        %515 = vst.msk [vmem:[%s230] sm:$0xff] %vm501, %v514
        %s516 = sand.u32 %s138, 1
        %s517 = scalar_lea.sflag [#allocation4], %s516
        %s518 = sand.u32 %s138, 1
        %s519 = smul.addr %s518, 8
        %s520 = scalar_lea.vmem [#allocation5], %s519
        // Predicated region
        $region45: #{forward.1} parent=39 // pred_check
          %p521 = pneg %p148
        $region46: #{forward.1} parent=39 // pred_check_branch
          %523 = sbr.rel (%p521) target = $region48
        $region47: #{forward.1} parent=39 // pred_region
          %s525 = ssub.s32 128, 128
          %526 = vsyncadd %s517, %s525
          %s527 = smul.addr %s20, 128
          %s528 = scalar_lea.hbm %s5, %s527
          %s530 = sshll.u32 %s520, 4
          %s531 = int_to_ptr.vmem [resolvable:$true] %s530
          %533 = dma.vmem_to_hbm [thread:$0]  %s531, 128, %s528, %s517
        $region48: #{forward.1} parent=39 // pred_fallthru
          _
      $region40: #{forward.1} parent=5 // pred_fallthru
        _
      %p534 = scmp.le.s32.totalorder 2, %s15
      // Predicated region
      $region49: #{forward.1} parent=5 // pred_check
        %p535 = pneg %p534
      $region50: #{forward.1} parent=5 // pred_check_branch
        %537 = sbr.rel (%p535) target = $region52
      $region51: #{forward.1} parent=5 // pred_region
        %s538 = ssub.s32 %s15, 2
        // Predicated region
        $region53: #{forward.1} parent=51 // pred_check
          %p539 = pneg %p154
        $region54: #{forward.1} parent=51 // pred_check_branch
          %541 = sbr.rel (%p539) target = $region56
        $region55: #{forward.1} parent=51 // pred_region
          %s542 = sand.u32 %s139, 1
          %s543 = scalar_lea.sflag [#allocation4], %s542
          %s544 = sand.u32 %s139, 1
          %s545 = smul.addr %s544, 8
          %s546 = scalar_lea.vmem [#allocation5], %s545
          %547 = dma.done %s543, 128
        $region56: #{forward.1} parent=51 // pred_fallthru
          _
      $region52: #{forward.1} parent=5 // pred_fallthru
        _
    $region6: #{forward.1} parent=1 // loop_footer
      %s19 = sadd.s32 1, %s15
    $region7: #{forward.1} parent=1 // loop_footer_branch
      %14 = sbr.rel target = $region3
    $region8: #{forward.1} parent=1 // loop_exit
      _
    %548 = vsyncpa [#allocation3], 1
    %s549 = scalar_lea.sflag [#allocation3], 1
    %550 = vsyncpa %s549, 1
    %551 = vsyncpa [#allocation4], 1
    %s552 = scalar_lea.sflag [#allocation4], 1
    %553 = vsyncpa %s552, 1

// kernel: forward.1
$region0: #{forward.1}
  #allocation0 [shape = 'u32[]', space=smem, size = 0x4, offset = 0x4, fixed_abs, tag = 'smem constant byte address 0x4 - core index']
  #allocation1 [shape = 'u32[144,128]{1,0:T(1,128)}', space=vmem, size = 0x12000, scoped, tag = 'internal scratch']
  %s0 = inlined_call_operand.vmem [shape: f32[12,32], index: 0, kind: input, shape index: {}]
  %s1 = inlined_call_operand.hbm [shape: f32[32,128], index: 1, kind: input, shape index: {}]
  %s2 = inlined_call_operand.vmem [shape: f32[128,128], index: 2, kind: input, shape index: {}]
  %s3 = inlined_call_operand.vmem [shape: f32[128,16], index: 3, kind: input, shape index: {}]
  %s4 = inlined_call_operand.vmem [shape: f32[3,128], index: 4, kind: input, shape index: {}]
  %s5 = inlined_call_operand.hbm [shape: f32[12,16], index: 5, kind: output, shape index: {}]
  %s6 = sld [smem:[#allocation0]]
  $region57: #{forward.1} parent=0
    _
  %s8 = ssub.s32 1, %s6
  %s9 = scalar_select 0, %s8, %s6
  $region1: #{forward.1} parent=0
    #allocation2 [shape = 'u8[16384]{0}', space=vmem, size = 0x4000, scoped, tag = 'input window, operand 1, single buffered']
    #allocation3 [shape = 's32[2]{0}', space=sflag, size = 0x8, scoped, tag = 'scoped memory for forward.1']
    #allocation4 [shape = 's32[2]{0}', space=sflag, size = 0x8, scoped, tag = 'scoped memory for forward.1']
    #allocation5 [shape = 'u8[8192]{0}', space=vmem, size = 0x2000, scoped, tag = 'output window, operand 0']
    %10 = vsyncpa [#allocation3], 0
    %11 = vsyncpa [#allocation4], 0
    %s12 = scalar_lea.sflag [#allocation4], 1
    %13 = vsyncpa %s12, 0
    loop: start=0, step=1, limit=4
    $region2: #{forward.1} parent=1 // loop_pre_header
      _
    $region3: #{forward.1} parent=1 // loop_header
      %s15 = sphi 0, %s19
      %p16 = scmp.ge.s32.totalorder %s15, 4
      %s25 = sphi 0, %s27
      %s28 = sphi 0, %s25
      %s29 = sphi 0, %s28
      %s45 = sphi 0, %s29
      %s49 = sphi 0, %s49
      %s51 = sphi 0, %s49
      %s52 = sphi 0, %s51
      %s66 = sphi 0, %s52
      %s70 = sphi 0, %s70
      %s72 = sphi 0, %s70
      %s73 = sphi 0, %s72
      %s87 = sphi 0, %s73
      %s91 = sphi 0, %s91
      %s93 = sphi 0, %s91
      %s94 = sphi 0, %s93
      %s108 = sphi 0, %s94
      %s112 = sphi 0, %s112
      %s114 = sphi 0, %s112
      %s115 = sphi 0, %s114
      %s129 = sphi 0, %s115
      %s135 = sphi 0, %s137
      %s138 = sphi 0, %s135
      %s139 = sphi 0, %s138
      %s155 = sphi 0, %s139
    $region4: #{forward.1} parent=1 // loop_header_branch
      %18 = sbr.rel (%p16) target = $region8
    $region5: #{forward.1} parent=1 // loop_body
      %s20 = ssub.s32 %s15, 1
      %s21 = ssub.s32 %s15, 2
      %s22 = sadd.s32 %s15, 1
      %s23 = ssub.s32 %s15, %s22
      %p24 = scmp.eq.s32.totalorder %s23, 0
      %s26 = sadd.s32 %s25, 1
      %s27 = scalar_select %p24, %s25, %s26
      %p30 = pneg %p24
      %p31 = scmp.eq.s32.totalorder %s15, 1
      %p32 = por %p30, %p31
      %p33 = scmp.ne.s32.totalorder %s25, %s28
      %p34 = scmp.eq.s32.totalorder %s15, 0
      %p35 = por %p33, %p34
      %p36 = scmp.ne.s32.totalorder %s25, %s28
      %p37 = scmp.eq.s32.totalorder %s20, 1
      %p38 = por %p36, %p37
      %p39 = scmp.ne.s32.totalorder %s28, %s29
      %p40 = scmp.eq.s32.totalorder %s20, 0
      %p41 = por %p39, %p40
      %p42 = scmp.ne.s32.totalorder %s28, %s29
      %p43 = scmp.eq.s32.totalorder %s21, 1
      %p44 = por %p42, %p43
      %p46 = scmp.ne.s32.totalorder %s29, %s45
      %p47 = scmp.eq.s32.totalorder %s21, 0
      %p48 = por %p46, %p47
      %s50 = sadd.s32 %s49, 1
      %p53 = scmp.eq.s32.totalorder %s15, 1
      %p54 = scmp.ne.s32.totalorder %s49, %s51
      %p55 = scmp.eq.s32.totalorder %s15, 0
      %p56 = por %p54, %p55
      %p57 = scmp.ne.s32.totalorder %s49, %s51
      %p58 = scmp.eq.s32.totalorder %s20, 1
      %p59 = por %p57, %p58
      %p60 = scmp.ne.s32.totalorder %s51, %s52
      %p61 = scmp.eq.s32.totalorder %s20, 0
      %p62 = por %p60, %p61
      %p63 = scmp.ne.s32.totalorder %s51, %s52
      %p64 = scmp.eq.s32.totalorder %s21, 1
      %p65 = por %p63, %p64
      %p67 = scmp.ne.s32.totalorder %s52, %s66
      %p68 = scmp.eq.s32.totalorder %s21, 0
      %p69 = por %p67, %p68
      %s71 = sadd.s32 %s70, 1
      %p74 = scmp.eq.s32.totalorder %s15, 1
      %p75 = scmp.ne.s32.totalorder %s70, %s72
      %p76 = scmp.eq.s32.totalorder %s15, 0
      %p77 = por %p75, %p76
      %p78 = scmp.ne.s32.totalorder %s70, %s72
      %p79 = scmp.eq.s32.totalorder %s20, 1
      %p80 = por %p78, %p79
      %p81 = scmp.ne.s32.totalorder %s72, %s73
      %p82 = scmp.eq.s32.totalorder %s20, 0
      %p83 = por %p81, %p82
      %p84 = scmp.ne.s32.totalorder %s72, %s73
      %p85 = scmp.eq.s32.totalorder %s21, 1
      %p86 = por %p84, %p85
      %p88 = scmp.ne.s32.totalorder %s73, %s87
      %p89 = scmp.eq.s32.totalorder %s21, 0
      %p90 = por %p88, %p89
      %s92 = sadd.s32 %s91, 1
      %p95 = scmp.eq.s32.totalorder %s15, 1
      %p96 = scmp.ne.s32.totalorder %s91, %s93
      %p97 = scmp.eq.s32.totalorder %s15, 0
      %p98 = por %p96, %p97
      %p99 = scmp.ne.s32.totalorder %s91, %s93
      %p100 = scmp.eq.s32.totalorder %s20, 1
      %p101 = por %p99, %p100
      %p102 = scmp.ne.s32.totalorder %s93, %s94
      %p103 = scmp.eq.s32.totalorder %s20, 0
      %p104 = por %p102, %p103
      %p105 = scmp.ne.s32.totalorder %s93, %s94
      %p106 = scmp.eq.s32.totalorder %s21, 1
      %p107 = por %p105, %p106
      %p109 = scmp.ne.s32.totalorder %s94, %s108
      %p110 = scmp.eq.s32.totalorder %s21, 0
      %p111 = por %p109, %p110
      %s113 = sadd.s32 %s112, 1
      %p116 = scmp.eq.s32.totalorder %s15, 1
      %p117 = scmp.ne.s32.totalorder %s112, %s114
      %p118 = scmp.eq.s32.totalorder %s15, 0
      %p119 = por %p117, %p118
      %p120 = scmp.ne.s32.totalorder %s112, %s114
      %p121 = scmp.eq.s32.totalorder %s20, 1
      %p122 = por %p120, %p121
      %p123 = scmp.ne.s32.totalorder %s114, %s115
      %p124 = scmp.eq.s32.totalorder %s20, 0
      %p125 = por %p123, %p124
      %p126 = scmp.ne.s32.totalorder %s114, %s115
      %p127 = scmp.eq.s32.totalorder %s21, 1
      %p128 = por %p126, %p127
      %p130 = scmp.ne.s32.totalorder %s115, %s129
      %p131 = scmp.eq.s32.totalorder %s21, 0
      %p132 = por %p130, %p131
      %s133 = ssub.s32 %s15, %s22
      %p134 = scmp.eq.s32.totalorder %s133, 0
      %s136 = sadd.s32 %s135, 1
      %s137 = scalar_select %p134, %s135, %s136
      %p140 = pneg %p134
      %p141 = scmp.eq.s32.totalorder %s15, 1
      %p142 = por %p140, %p141
      %p143 = scmp.ne.s32.totalorder %s135, %s138
      %p144 = scmp.eq.s32.totalorder %s15, 0
      %p145 = por %p143, %p144
      %p146 = scmp.ne.s32.totalorder %s135, %s138
      %p147 = scmp.eq.s32.totalorder %s20, 1
      %p148 = por %p146, %p147
      %p149 = scmp.ne.s32.totalorder %s138, %s139
      %p150 = scmp.eq.s32.totalorder %s20, 0
      %p151 = por %p149, %p150
      %p152 = scmp.ne.s32.totalorder %s138, %s139
      %p153 = scmp.eq.s32.totalorder %s21, 1
      %p154 = por %p152, %p153
      %p156 = scmp.ne.s32.totalorder %s139, %s155
      %p157 = scmp.eq.s32.totalorder %s21, 0
      %p158 = por %p156, %p157
      %p159 = scmp.le.s32.totalorder 1, %s15
      %p160 = scmp.lt.s32.totalorder %s15, 3
      %p161 = pnand %p159, %p160
      %p162 = pneg %p161
      // Predicated region
      $region9: #{forward.1} parent=5 // pred_check
        _
      $region10: #{forward.1} parent=5 // pred_check_branch
        %164 = sbr.rel (%p161) target = $region12
      $region11: #{forward.1} parent=5 // pred_region
        %s165 = ssub.s32 %s15, 1
        // Predicated region
        $region13: #{forward.1} parent=11 // pred_check
          %p166 = pneg %p62
        $region14: #{forward.1} parent=11 // pred_check_branch
          %168 = sbr.rel (%p166) target = $region16
        $region15: #{forward.1} parent=11 // pred_region
          %s170 = ssub.s32 512, 512
          %171 = vsyncadd [#allocation3], %s170
          %s172 = sshll.u32 [#allocation2], 4
          %s173 = int_to_ptr.vmem [resolvable:$true] %s172
          %178 = dma.hbm_to_vmem [thread:$0]  %s1, 512, %s173, [#allocation3], 128, 128, 8
        $region16: #{forward.1} parent=11 // pred_fallthru
          _
        // Predicated region
        $region17: #{forward.1} parent=11 // pred_check
          %p179 = pneg %p83
        $region18: #{forward.1} parent=11 // pred_check_branch
          %181 = sbr.rel (%p179) target = $region20
        $region19: #{forward.1} parent=11 // pred_region
          _
        $region20: #{forward.1} parent=11 // pred_fallthru
          _
        // Predicated region
        $region21: #{forward.1} parent=11 // pred_check
          %p182 = pneg %p104
        $region22: #{forward.1} parent=11 // pred_check_branch
          %184 = sbr.rel (%p182) target = $region24
        $region23: #{forward.1} parent=11 // pred_region
          _
        $region24: #{forward.1} parent=11 // pred_fallthru
          _
        // Predicated region
        $region25: #{forward.1} parent=11 // pred_check
          %p185 = pneg %p125
        $region26: #{forward.1} parent=11 // pred_check_branch
          %187 = sbr.rel (%p185) target = $region28
        $region27: #{forward.1} parent=11 // pred_region
          _
        $region28: #{forward.1} parent=11 // pred_fallthru
          _
      $region12: #{forward.1} parent=5 // pred_fallthru
        _
      %p188 = scmp.lt.s32.totalorder %s15, 2
      // Predicated region
      $region29: #{forward.1} parent=5 // pred_check
        %p189 = pneg %p188
      $region30: #{forward.1} parent=5 // pred_check_branch
        %191 = sbr.rel (%p189) target = $region32
      $region31: #{forward.1} parent=5 // pred_region
        // Predicated region
        $region33: #{forward.1} parent=31 // pred_check
          %p192 = pneg %p35
        $region34: #{forward.1} parent=31 // pred_check_branch
          %194 = sbr.rel (%p192) target = $region36
        $region35: #{forward.1} parent=31 // pred_region
          %p195 = scmp.lt.s32.totalorder %s15, 1
          %s196 = scalar_select %p195, %s15, 1
          %s197 = smul.addr %s196, 8
          %s198 = scalar_lea.vmem %s0, %s197
        $region36: #{forward.1} parent=31 // pred_fallthru
          _
      $region32: #{forward.1} parent=5 // pred_fallthru
        _
      %p199 = scmp.le.s32.totalorder 1, %s15
      %p200 = scmp.lt.s32.totalorder %s15, 3
      %p201 = pnand %p199, %p200
      %p202 = pneg %p201
      // Predicated region
      $region37: #{forward.1} parent=5 // pred_check
        _
      $region38: #{forward.1} parent=5 // pred_check_branch
        %204 = sbr.rel (%p201) target = $region40
      $region39: #{forward.1} parent=5 // pred_region
        %s205 = ssub.s32 %s15, 1
        // Predicated region
        $region41: #{forward.1} parent=39 // pred_check
          %p206 = pneg %p62
        $region42: #{forward.1} parent=39 // pred_check_branch
          %208 = sbr.rel (%p206) target = $region44
        $region43: #{forward.1} parent=39 // pred_region
          %209 = dma.done [#allocation3], 512
        $region44: #{forward.1} parent=39 // pred_fallthru
          _
        %p210 = scmp.lt.s32.totalorder %s20, 1
        %s211 = scalar_select %p210, %s20, 1
        %s212 = smul.addr %s211, 8
        %s213 = scalar_lea.vmem %s0, %s212
        %p214 = pneg %p41
        %p215 = pneg %p38
        %p216 = pneg %p62
        %p217 = pneg %p59
        %p218 = pneg %p83
        %p219 = pneg %p80
        %p220 = pneg %p104
        %p221 = pneg %p101
        %p222 = pneg %p125
        %p223 = pneg %p122
        %p224 = pneg %p151
        %p225 = pneg %p148
        %s226 = sand.u32 %s138, 1
        %s227 = scalar_lea.sflag [#allocation4], %s226
        %s228 = sand.u32 %s138, 1
        %s229 = smul.addr %s228, 8
        %s230 = scalar_lea.vmem [#allocation5], %s229
        %p231 = scmp.lt.s32.totalorder %s20, 1
        %s232 = scalar_select %p231, %s20, 1
        %s233 = smul.addr %s232, 8
        %s234 = scalar_lea.vmem %s0, %s233
        %v235 = vld [vmem:[%s4] sm:$0x7]
        %v236 = vld [vmem:[%s234] sm:$0xff]
        %v237 = vld [vmem:[#allocation2] sm:$0xff]
        %v238 = vld [vmem:[#allocation2 + $0x8] sm:$0xff]
        %v239 = vld [vmem:[#allocation2 + $0x10] sm:$0xff]
        %v240 = vld [vmem:[#allocation2 + $0x18] sm:$0xff]
        %v241 = vlaneseq
        %v242 = vshrl.u32 %v241, 7
        %v243 = vsub.s32 0, %v242
        %v244 = vrot.slane %v235, %v243
        %vm245 = vcmask 261120
        %v247 = vsel %vm245, %v236, 0
        %249 = vmatprep.subr.mxu0 0.0
        %250 = vmatpush1.msra.mxu0 %v237
        %251 = vmatprep.subr.mxu0 0.0
        %252 = vmatpush1.msra.mxu0 %v238
        %253 = vmatprep.subr.mxu0 0.0
        %254 = vmatpush1.msra.mxu0 %v239
        %255 = vmatprep.subr.mxu0 0.0
        %256 = vmatpush1.msra.mxu0 %v240
        %257 = vmatprep.subr.mxu0 0.0
        %258 = vmatpush1.msra.mxu0 0.0
        %259 = vmatprep.subr.mxu0 0.0
        %260 = vmatpush1.msra.mxu0 0.0
        %261 = vmatprep.subr.mxu0 0.0
        %262 = vmatpush1.msra.mxu0 0.0
        %263 = vmatprep.subr.mxu0 0.0
        %264 = vmatpush1.msra.mxu0 0.0
        %265 = vmatprep.subr.mxu0 0.0
        %266 = vmatpush1.msra.mxu0 0.0
        %267 = vmatprep.subr.mxu0 0.0
        %268 = vmatpush1.msra.mxu0 0.0
        %269 = vmatprep.subr.mxu0 0.0
        %270 = vmatpush1.msra.mxu0 0.0
        %271 = vmatprep.subr.mxu0 0.0
        %272 = vmatpush1.msra.mxu0 0.0
        %273 = vmatprep.subr.mxu0 0.0
        %274 = vmatpush1.msra.mxu0 0.0
        %275 = vmatprep.subr.mxu0 0.0
        %276 = vmatpush1.msra.mxu0 0.0
        %277 = vmatprep.subr.mxu0 0.0
        %278 = vmatpush1.msra.mxu0 0.0
        %279 = vmatprep.subr.mxu0 0.0
        %280 = vmatpush1.msra.mxu0 0.0
        %281 = vmatprep.subr.mxu0 0.0
        %282 = vmatpush1.msra.mxu0 0.0
        %283 = vmatprep.subr.mxu0 0.0
        %284 = vmatpush1.msra.mxu0 0.0
        %285 = vmatprep.subr.mxu0 0.0
        %286 = vmatpush1.msra.mxu0 0.0
        %287 = vmatprep.subr.mxu0 0.0
        %288 = vmatpush1.msra.mxu0 0.0
        %289 = vmatprep.subr.mxu0 0.0
        %290 = vmatpush1.msra.mxu0 0.0
        %291 = vmatprep.subr.mxu0 0.0
        %292 = vmatpush1.msra.mxu0 0.0
        %293 = vmatprep.subr.mxu0 0.0
        %294 = vmatpush1.msra.mxu0 0.0
        %295 = vmatprep.subr.mxu0 0.0
        %296 = vmatpush1.msra.mxu0 0.0
        %297 = vmatprep.subr.mxu0 0.0
        %298 = vmatpush1.msra.mxu0 0.0
        %299 = vmatprep.subr.mxu0 0.0
        %300 = vmatpush1.msra.mxu0 0.0
        %301 = vmatprep.subr.mxu0 0.0
        %302 = vmatpush1.msra.mxu0 0.0
        %303 = vmatprep.subr.mxu0 0.0
        %304 = vmatpush1.msra.mxu0 0.0
        %305 = vmatprep.subr.mxu0 0.0
        %306 = vmatpush1.msra.mxu0 0.0
        %307 = vmatprep.subr.mxu0 0.0
        %308 = vmatpush1.msra.mxu0 0.0
        %309 = vmatprep.subr.mxu0 0.0
        %310 = vmatpush1.msra.mxu0 0.0
        %311 = vmatprep.subr.mxu0 0.0
        %312 = vmatpush1.msra.mxu0 0.0
        %313 = vmatprep.mubr.f32.mxu0 0.0
        %314 = vmatmul.mubr.f32.gmra.mrb[0].mxu0 %v247
        %v315 = vpop.f32.mrb[0].mxu0
        %v316 = vadd.f32 %v244, %v315
        %v317 = vpop.f32.mrb[0].mxu0
        %318 = vdwg.mxu0
        %v319 = vmax.f32 %v316, 0.0
        %v320 = vld [vmem:[%s2] sm:$0xff]
        %v321 = vld [vmem:[%s2 + $0x8] sm:$0xff]
        %v322 = vld [vmem:[%s2 + $0x10] sm:$0xff]
        %v323 = vld [vmem:[%s2 + $0x18] sm:$0xff]
        %v324 = vld [vmem:[%s2 + $0x20] sm:$0xff]
        %v325 = vld [vmem:[%s2 + $0x28] sm:$0xff]
        %v326 = vld [vmem:[%s2 + $0x30] sm:$0xff]
        %v327 = vld [vmem:[%s2 + $0x38] sm:$0xff]
        %v328 = vld [vmem:[%s2 + $0x40] sm:$0xff]
        %v329 = vld [vmem:[%s2 + $0x48] sm:$0xff]
        %v330 = vld [vmem:[%s2 + $0x50] sm:$0xff]
        %v331 = vld [vmem:[%s2 + $0x58] sm:$0xff]
        %v332 = vld [vmem:[%s2 + $0x60] sm:$0xff]
        %v333 = vld [vmem:[%s2 + $0x68] sm:$0xff]
        %v334 = vld [vmem:[%s2 + $0x70] sm:$0xff]
        %v335 = vld [vmem:[%s2 + $0x78] sm:$0xff]
        %v336 = vlaneseq
        %v337 = vshrl.u32 %v336, 7
        %v338 = vsub.s32 1, %v337
        %v339 = vrot.slane %v235, %v338
        %340 = vmatprep.subr.mxu0 0.0
        %341 = vmatpush1.msra.mxu0 %v320
        %342 = vmatprep.subr.mxu0 0.0
        %343 = vmatpush1.msra.mxu0 %v321
        %344 = vmatprep.subr.mxu0 0.0
        %345 = vmatpush1.msra.mxu0 %v322
        %346 = vmatprep.subr.mxu0 0.0
        %347 = vmatpush1.msra.mxu0 %v323
        %348 = vmatprep.subr.mxu0 0.0
        %349 = vmatpush1.msra.mxu0 %v324
        %350 = vmatprep.subr.mxu0 0.0
        %351 = vmatpush1.msra.mxu0 %v325
        %352 = vmatprep.subr.mxu0 0.0
        %353 = vmatpush1.msra.mxu0 %v326
        %354 = vmatprep.subr.mxu0 0.0
        %355 = vmatpush1.msra.mxu0 %v327
        %356 = vmatprep.subr.mxu0 0.0
        %357 = vmatpush1.msra.mxu0 %v328
        %358 = vmatprep.subr.mxu0 0.0
        %359 = vmatpush1.msra.mxu0 %v329
        %360 = vmatprep.subr.mxu0 0.0
        %361 = vmatpush1.msra.mxu0 %v330
        %362 = vmatprep.subr.mxu0 0.0
        %363 = vmatpush1.msra.mxu0 %v331
        %364 = vmatprep.subr.mxu0 0.0
        %365 = vmatpush1.msra.mxu0 %v332
        %366 = vmatprep.subr.mxu0 0.0
        %367 = vmatpush1.msra.mxu0 %v333
        %368 = vmatprep.subr.mxu0 0.0
        %369 = vmatpush1.msra.mxu0 %v334
        %370 = vmatprep.subr.mxu0 0.0
        %371 = vmatpush1.msra.mxu0 %v335
        %372 = vmatprep.subr.mxu0 0.0
        %373 = vmatpush1.msra.mxu0 0.0
        %374 = vmatprep.subr.mxu0 0.0
        %375 = vmatpush1.msra.mxu0 0.0
        %376 = vmatprep.subr.mxu0 0.0
        %377 = vmatpush1.msra.mxu0 0.0
        %378 = vmatprep.subr.mxu0 0.0
        %379 = vmatpush1.msra.mxu0 0.0
        %380 = vmatprep.subr.mxu0 0.0
        %381 = vmatpush1.msra.mxu0 0.0
        %382 = vmatprep.subr.mxu0 0.0
        %383 = vmatpush1.msra.mxu0 0.0
        %384 = vmatprep.subr.mxu0 0.0
        %385 = vmatpush1.msra.mxu0 0.0
        %386 = vmatprep.subr.mxu0 0.0
        %387 = vmatpush1.msra.mxu0 0.0
        %388 = vmatprep.subr.mxu0 0.0
        %389 = vmatpush1.msra.mxu0 0.0
        %390 = vmatprep.subr.mxu0 0.0
        %391 = vmatpush1.msra.mxu0 0.0
        %392 = vmatprep.subr.mxu0 0.0
        %393 = vmatpush1.msra.mxu0 0.0
        %394 = vmatprep.subr.mxu0 0.0
        %395 = vmatpush1.msra.mxu0 0.0
        %396 = vmatprep.subr.mxu0 0.0
        %397 = vmatpush1.msra.mxu0 0.0
        %398 = vmatprep.subr.mxu0 0.0
        %399 = vmatpush1.msra.mxu0 0.0
        %400 = vmatprep.subr.mxu0 0.0
        %401 = vmatpush1.msra.mxu0 0.0
        %402 = vmatprep.subr.mxu0 0.0
        %403 = vmatpush1.msra.mxu0 0.0
        %404 = vmatprep.mubr.f32.mxu0 0.0
        %405 = vmatmul.mubr.f32.gmra.mrb[0].mxu0 %v319
        %v406 = vpop.f32.mrb[0].mxu0
        %v407 = vadd.f32 %v339, %v406
        %v408 = vpop.f32.mrb[0].mxu0
        %409 = vdwg.mxu0
        %v410 = vmax.f32 %v407, 0.0
        %v411 = vld [vmem:[%s3] sm:$0xff]
        %v412 = vld [vmem:[%s3 + $0x8] sm:$0xff]
        %v413 = vld [vmem:[%s3 + $0x10] sm:$0xff]
        %v414 = vld [vmem:[%s3 + $0x18] sm:$0xff]
        %v415 = vld [vmem:[%s3 + $0x20] sm:$0xff]
        %v416 = vld [vmem:[%s3 + $0x28] sm:$0xff]
        %v417 = vld [vmem:[%s3 + $0x30] sm:$0xff]
        %v418 = vld [vmem:[%s3 + $0x38] sm:$0xff]
        %v419 = vld [vmem:[%s3 + $0x40] sm:$0xff]
        %v420 = vld [vmem:[%s3 + $0x48] sm:$0xff]
        %v421 = vld [vmem:[%s3 + $0x50] sm:$0xff]
        %v422 = vld [vmem:[%s3 + $0x58] sm:$0xff]
        %v423 = vld [vmem:[%s3 + $0x60] sm:$0xff]
        %v424 = vld [vmem:[%s3 + $0x68] sm:$0xff]
        %v425 = vld [vmem:[%s3 + $0x70] sm:$0xff]
        %v426 = vld [vmem:[%s3 + $0x78] sm:$0xff]
        %v427 = vlaneseq
        %v428 = vshrl.u32 %v427, 7
        %v429 = vsub.s32 2, %v428
        %v430 = vrot.slane %v235, %v429
        %431 = vmatprep.subr.mxu0 0.0
        %432 = vmatpush1.msra.mxu0 %v411
        %433 = vmatprep.subr.mxu0 0.0
        %434 = vmatpush1.msra.mxu0 %v412
        %435 = vmatprep.subr.mxu0 0.0
        %436 = vmatpush1.msra.mxu0 %v413
        %437 = vmatprep.subr.mxu0 0.0
        %438 = vmatpush1.msra.mxu0 %v414
        %439 = vmatprep.subr.mxu0 0.0
        %440 = vmatpush1.msra.mxu0 %v415
        %441 = vmatprep.subr.mxu0 0.0
        %442 = vmatpush1.msra.mxu0 %v416
        %443 = vmatprep.subr.mxu0 0.0
        %444 = vmatpush1.msra.mxu0 %v417
        %445 = vmatprep.subr.mxu0 0.0
        %446 = vmatpush1.msra.mxu0 %v418
        %447 = vmatprep.subr.mxu0 0.0
        %448 = vmatpush1.msra.mxu0 %v419
        %449 = vmatprep.subr.mxu0 0.0
        %450 = vmatpush1.msra.mxu0 %v420
        %451 = vmatprep.subr.mxu0 0.0
        %452 = vmatpush1.msra.mxu0 %v421
        %453 = vmatprep.subr.mxu0 0.0
        %454 = vmatpush1.msra.mxu0 %v422
        %455 = vmatprep.subr.mxu0 0.0
        %456 = vmatpush1.msra.mxu0 %v423
        %457 = vmatprep.subr.mxu0 0.0
        %458 = vmatpush1.msra.mxu0 %v424
        %459 = vmatprep.subr.mxu0 0.0
        %460 = vmatpush1.msra.mxu0 %v425
        %461 = vmatprep.subr.mxu0 0.0
        %462 = vmatpush1.msra.mxu0 %v426
        %463 = vmatprep.subr.mxu0 0.0
        %464 = vmatpush1.msra.mxu0 0.0
        %465 = vmatprep.subr.mxu0 0.0
        %466 = vmatpush1.msra.mxu0 0.0
        %467 = vmatprep.subr.mxu0 0.0
        %468 = vmatpush1.msra.mxu0 0.0
        %469 = vmatprep.subr.mxu0 0.0
        %470 = vmatpush1.msra.mxu0 0.0
        %471 = vmatprep.subr.mxu0 0.0
        %472 = vmatpush1.msra.mxu0 0.0
        %473 = vmatprep.subr.mxu0 0.0
        %474 = vmatpush1.msra.mxu0 0.0
        %475 = vmatprep.subr.mxu0 0.0
        %476 = vmatpush1.msra.mxu0 0.0
        %477 = vmatprep.subr.mxu0 0.0
        %478 = vmatpush1.msra.mxu0 0.0
        %479 = vmatprep.subr.mxu0 0.0
        %480 = vmatpush1.msra.mxu0 0.0
        %481 = vmatprep.subr.mxu0 0.0
        %482 = vmatpush1.msra.mxu0 0.0
        %483 = vmatprep.subr.mxu0 0.0
        %484 = vmatpush1.msra.mxu0 0.0
        %485 = vmatprep.subr.mxu0 0.0
        %486 = vmatpush1.msra.mxu0 0.0
        %487 = vmatprep.subr.mxu0 0.0
        %488 = vmatpush1.msra.mxu0 0.0
        %489 = vmatprep.subr.mxu0 0.0
        %490 = vmatpush1.msra.mxu0 0.0
        %491 = vmatprep.subr.mxu0 0.0
        %492 = vmatpush1.msra.mxu0 0.0
        %493 = vmatprep.subr.mxu0 0.0
        %494 = vmatpush1.msra.mxu0 0.0
        %495 = vmatprep.mubr.f32.mxu0 0.0
        %496 = vmatmul.mubr.f32.gmra.mrb[0].mxu0 %v410
        %v497 = vpop.f32.mrb[0].mxu0
        %v498 = vadd.f32 %v430, %v497
        %v499 = vpop.f32.mrb[0].mxu0
        %500 = vdwg.mxu0
        %vm501 = vcmask 130048
        %v502 = vsel %vm501, %v498, -inf
        %503 = vmax.xlane.f32.xlu0 %v502
        %v504 = vpop.xlane.xlu0 %503
        %v505 = vsub.f32 %v498, %v504
        %v506 = vmul.f32 %v505, 1.442695
        %v507 = vpow.pop %v506
        %v508 = vsel %vm501, %v507, 0.0
        %509 = vadd.xlane.f32.xlu0 %v508
        %v510 = vpop.xlane.xlu0 %509
        %v511 = vlog2.pop %v510
        %v512 = vmul.f32 %v511, 0.6931472
        %v513 = vadd.f32 %v512, %v504
        %v514 = vsub.f32 %v498, %v513
        %515 = vst.msk [vmem:[%s230] sm:$0xff] %vm501, %v514
        %s516 = sand.u32 %s138, 1
        %s517 = scalar_lea.sflag [#allocation4], %s516
        %s518 = sand.u32 %s138, 1
        %s519 = smul.addr %s518, 8
        %s520 = scalar_lea.vmem [#allocation5], %s519
        // Predicated region
        $region45: #{forward.1} parent=39 // pred_check
          %p521 = pneg %p148
        $region46: #{forward.1} parent=39 // pred_check_branch
          %523 = sbr.rel (%p521) target = $region48
        $region47: #{forward.1} parent=39 // pred_region
          %s525 = ssub.s32 128, 128
          %526 = vsyncadd %s517, %s525
          %s527 = smul.addr %s20, 128
          %s528 = scalar_lea.hbm %s5, %s527
          %s530 = sshll.u32 %s520, 4
          %s531 = int_to_ptr.vmem [resolvable:$true] %s530
          %533 = dma.vmem_to_hbm [thread:$0]  %s531, 128, %s528, %s517
        $region48: #{forward.1} parent=39 // pred_fallthru
          _
      $region40: #{forward.1} parent=5 // pred_fallthru
        _
      %p534 = scmp.le.s32.totalorder 2, %s15
      // Predicated region
      $region49: #{forward.1} parent=5 // pred_check
        %p535 = pneg %p534
      $region50: #{forward.1} parent=5 // pred_check_branch
        %537 = sbr.rel (%p535) target = $region52
      $region51: #{forward.1} parent=5 // pred_region
        %s538 = ssub.s32 %s15, 2
        // Predicated region
        $region53: #{forward.1} parent=51 // pred_check
          %p539 = pneg %p154
        $region54: #{forward.1} parent=51 // pred_check_branch
          %541 = sbr.rel (%p539) target = $region56
        $region55: #{forward.1} parent=51 // pred_region
          %s542 = sand.u32 %s139, 1
          %s543 = scalar_lea.sflag [#allocation4], %s542
          %s544 = sand.u32 %s139, 1
          %s545 = smul.addr %s544, 8
          %s546 = scalar_lea.vmem [#allocation5], %s545
          %547 = dma.done %s543, 128
        $region56: #{forward.1} parent=51 // pred_fallthru
          _
      $region52: #{forward.1} parent=5 // pred_fallthru
        _
    $region6: #{forward.1} parent=1 // loop_footer
      %s19 = sadd.s32 1, %s15
    $region7: #{forward.1} parent=1 // loop_footer_branch
      %14 = sbr.rel target = $region3
    $region8: #{forward.1} parent=1 // loop_exit
      _
    %548 = vsyncpa [#allocation3], 1
    %s549 = scalar_lea.sflag [#allocation3], 1
    %550 = vsyncpa %s549, 1
    %551 = vsyncpa [#allocation4], 1
    %s552 = scalar_lea.sflag [#allocation4], 1
    %553 = vsyncpa %s552, 1

</llo_original>
